<compile_context>
chip_gen: v7x
topology: tpu7x:2x2x1
jax: 0.10.0
libtpu: 0.0.40
codegen_flags: <defaults>
</compile_context>

<pallas_src>
import jax
import jax.numpy as jnp
from jax.experimental import pallas as pl
from jax.experimental.pallas import tpu as pltpu


LANE = 128


def _round_up(x, m):
    return ((x + m - 1) // m) * m


def _svdpp_kernel(p_ref, q_ref, bias_ref, out_ref):
    # p_ref, q_ref: (TB, F) VMEM  -- batch on sublanes, factors on lanes.
    # bias_ref, out_ref: (TB, 1) VMEM  -- b_u + b_i + mu pre-folded.
    tb, f = p_ref.shape
    row_chunk = min(tb, 1024)   # bound live temporaries for large tiles
    lane_chunk = min(f, 512)    # bound live temporaries for large F
    for r0 in range(0, tb, row_chunk):
        r1 = min(r0 + row_chunk, tb)
        acc = bias_ref[r0:r1, :].astype(jnp.float32)
        for c0 in range(0, f, lane_chunk):
            c1 = min(c0 + lane_chunk, f)
            p = p_ref[r0:r1, c0:c1].astype(jnp.float32)
            q = q_ref[r0:r1, c0:c1].astype(jnp.float32)
            acc = acc + jnp.sum(p * q, axis=-1, keepdims=True)
        out_ref[r0:r1, :] = acc


def _pad_ids(ids, n_pad):
    pad = n_pad - ids.shape[0]
    if pad == 0:
        return ids
    return jnp.concatenate([ids, jnp.zeros((pad,), ids.dtype)])


def svdpp_forward(P, Q, user_bias, item_bias, global_bias, user_id, item_id,
                  *, max_tile_b=None):
    """Equivalent of SVDpp.forward(user_id, item_id, u_i_dict).

    `u_i_dict` is unused in the reference torch forward (the bound method
    `dot = torch.mul(...).sum` is never called), so it is omitted.
    """
    B = int(user_id.shape[0])
    F = int(P.shape[1])
    itemsize = jnp.dtype(P.dtype).itemsize

    # ---- per-generation VMEM budget --------------------------------------
    try:
        phys_vmem = int(getattr(pltpu.get_tpu_info(),
                                "vmem_capacity_bytes", 64 << 20))
    except Exception:
        phys_vmem = 64 << 20                      # conservative (v7x-sized)
    # v7x (64 MiB physical) -> 40 MiB budget; v5e/v6e (128 MiB) -> 64 MiB.
    vmem_budget = min(64 << 20, (phys_vmem * 5) // 8)

    # Conservative double-buffered VMEM bytes per batch row (lane-padded):
    #   factors: 2 operands x 2 buffers x round_up(F,128) x itemsize
    #   bias+out: 2 arrays  x 2 buffers x 128 lanes x 4 B
    f_lanes = _round_up(F, LANE)
    bytes_per_row = 4 * f_lanes * itemsize + 4 * LANE * 4

    # ---- tile selection ----------------------------------------------------
    # Target ~3 MiB of real factor bytes per grid step, capped by VMEM budget.
    target_step_bytes = 3 << 20
    tb_from_target = target_step_bytes // max(1, 2 * F * itemsize)
    tb_from_vmem = vmem_budget // bytes_per_row
    TB = max(LANE, (min(tb_from_target, tb_from_vmem) // LANE) * LANE)
    if max_tile_b is not None:
        TB = max(LANE, min(TB, (int(max_tile_b) // LANE) * LANE))

    B_pad = _round_up(B, LANE)
    TB = min(TB, B_pad)
    # Megacore (v7x 2-TC): ensure >= 2 grid steps whenever the batch allows.
    if B_pad >= 2 * LANE:
        TB = min(TB, _round_up(B_pad // 2, LANE))
    B_pad = _round_up(B_pad, TB)
    num_tiles = B_pad // TB

    vmem_limit = int(min(max(vmem_budget, TB * bytes_per_row + (2 << 20)),
                         phys_vmem))

    # ---- gathers (glue, plain JAX; batch-major, no transpose) --------------
    uid = _pad_ids(user_id, B_pad)
    iid = _pad_ids(item_id, B_pad)
    P_u = jnp.take(P, uid, axis=0)                     # (B_pad, F), native dtype
    Q_i = jnp.take(Q, iid, axis=0)                     # (B_pad, F), native dtype
    bias = (jnp.take(user_bias, uid, axis=0)
            + jnp.take(item_bias, iid, axis=0)
            + global_bias.reshape(1, 1)).astype(jnp.float32)   # (B_pad, 1)

    cost = pl.CostEstimate(
        flops=2 * B_pad * F + B_pad,
        transcendentals=0,
        bytes_accessed=2 * B_pad * F * itemsize + 2 * B_pad * 4,
    )

    out = pl.pallas_call(
        _svdpp_kernel,
        out_shape=jax.ShapeDtypeStruct((B_pad, 1), jnp.float32),
        grid_spec=pltpu.PrefetchScalarGridSpec(
            num_scalar_prefetch=0,
            grid=(num_tiles,),
            in_specs=[
                pl.BlockSpec((TB, F), lambda i: (i, 0)),   # P_u tile
                pl.BlockSpec((TB, F), lambda i: (i, 0)),   # Q_i tile
                pl.BlockSpec((TB, 1), lambda i: (i, 0)),   # b_u + b_i + mu
            ],
            out_specs=pl.BlockSpec((TB, 1), lambda i: (i, 0)),
        ),
        compiler_params=pltpu.CompilerParams(
            dimension_semantics=("parallel",),
            vmem_limit_bytes=vmem_limit,
        ),
        cost_estimate=cost,
    )(P_u, Q_i, bias)

    # torch: outputs.flatten() -> shape (B,); drop padded tail.
    return out.reshape(-1)[:B]


if __name__ == "__main__":
    # Deterministic parameter init (nn.Embedding default ~ N(0,1); global_bias = 0)
    num_factors = 32
    num_users = 64
    num_items = 48
    batch = 8

    key = jax.random.PRNGKey(0)
    k1, k2, k3, k4, k5, k6 = jax.random.split(key, 6)

    P = jax.random.normal(k1, (num_users, num_factors), dtype=jnp.float32)
    Q = jax.random.normal(k2, (num_items, num_factors), dtype=jnp.float32)
    user_bias = jax.random.normal(k3, (num_users, 1), dtype=jnp.float32)
    item_bias = jax.random.normal(k4, (num_items, 1), dtype=jnp.float32)
    global_bias = jnp.zeros((1,), dtype=jnp.float32)

    user_id = jax.random.randint(k5, (batch,), 0, num_users)
    item_id = jax.random.randint(k6, (batch,), 0, num_items)

    out = svdpp_forward(P, Q, user_bias, item_bias, global_bias, user_id, item_id)
    out = jax.block_until_ready(out)

    # Pure-JAX reference (mirrors the torch forward for len(b_u) >= 2).
    P_u = P[user_id]
    Q_i = Q[item_id]
    ref = (global_bias[0]
           + jnp.squeeze(user_bias[user_id])
           + jnp.squeeze(item_bias[item_id])
           + jnp.sum(P_u * Q_i, axis=1)).reshape(-1)

    assert out.shape == (batch,), out.shape
    assert jnp.allclose(out, ref, rtol=1e-5, atol=1e-5), (out, ref)
    print("KERNEL_OK")
</pallas_src>

<mosaic_0001>
module attributes {stable_mosaic.version = 11 : i64} {
  func.func @_svdpp_kernel(%arg0: i32, %arg1: memref<128x32xf32, #tpu.memory_space<vmem>>, %arg2: memref<128x32xf32, #tpu.memory_space<vmem>>, %arg3: memref<128x1xf32, #tpu.memory_space<vmem>>, %arg4: memref<128x1xf32, #tpu.memory_space<vmem>>) attributes {dimension_semantics = [#tpu.dimension_semantics<parallel>], iteration_bounds = array<i64: 1>, scalar_prefetch = 0 : i64, scratch_operands = 0 : i64, tpu.core_type = #tpu.core_type<tc>, window_params = [{transform_indices = @transform_0, window_bounds = array<i64: 128, 32>}, {transform_indices = @transform_1, window_bounds = array<i64: 128, 32>}, {transform_indices = @transform_2, window_bounds = array<i64: 128, 1>}, {transform_indices = @transform_3, window_bounds = array<i64: 128, 1>}]} {
    %c0 = arith.constant 0 : index
    %c0_0 = arith.constant 0 : index
    %0 = vector.load %arg3[%c0, %c0_0] : memref<128x1xf32, #tpu.memory_space<vmem>>, vector<128x1xf32>
    %c0_1 = arith.constant 0 : index
    %c0_2 = arith.constant 0 : index
    %1 = vector.load %arg1[%c0_1, %c0_2] : memref<128x32xf32, #tpu.memory_space<vmem>>, vector<128x32xf32>
    %c0_3 = arith.constant 0 : index
    %c0_4 = arith.constant 0 : index
    %2 = vector.load %arg2[%c0_3, %c0_4] : memref<128x32xf32, #tpu.memory_space<vmem>>, vector<128x32xf32>
    %3 = arith.mulf %1, %2 : vector<128x32xf32>
    %cst = arith.constant dense<0.000000e+00> : vector<128xf32>
    %4 = vector.multi_reduction <add>, %3, %cst [1] : vector<128x32xf32> to vector<128xf32>
    %5 = vector.shape_cast %4 : vector<128xf32> to vector<128x1xf32>
    %6 = arith.addf %0, %5 : vector<128x1xf32>
    %c0_5 = arith.constant 0 : index
    %c0_6 = arith.constant 0 : index
    %7 = vector.load %arg4[%c0_5, %c0_6] : memref<128x1xf32, #tpu.memory_space<vmem>>, vector<128x1xf32>
    tpu.vector_store %arg4[%c0_5, %c0_6], %6 {strides = array<i32>} : memref<128x1xf32, #tpu.memory_space<vmem>>, vector<128x1xf32>,
    return
  }
  func.func @transform_0(%arg0: i32) -> (i32, i32) {
    %c0_i32 = arith.constant 0 : i32
    %c0_i32_0 = arith.constant 0 : i32
    return %arg0, %c0_i32 : i32, i32
  }
  func.func @transform_1(%arg0: i32) -> (i32, i32) {
    %c0_i32 = arith.constant 0 : i32
    %c0_i32_0 = arith.constant 0 : i32
    return %arg0, %c0_i32 : i32, i32
  }
  func.func @transform_2(%arg0: i32) -> (i32, i32) {
    %c0_i32 = arith.constant 0 : i32
    %c0_i32_0 = arith.constant 0 : i32
    return %arg0, %c0_i32 : i32, i32
  }
  func.func @transform_3(%arg0: i32) -> (i32, i32) {
    %c0_i32 = arith.constant 0 : i32
    %c0_i32_0 = arith.constant 0 : i32
    return %arg0, %c0_i32 : i32, i32
  }
}

</mosaic_0001>

<llo_original>
// kernel: tpu_custom_call.1
$region0: #{tpu_custom_call.1}
  #allocation0 [shape = 'u32[]', space=smem, size = 0x4, offset = 0x4, fixed_abs, tag = 'smem constant byte address 0x4 - core index']
  #allocation1 [shape = 'u32[144,128]{1,0:T(1,128)}', space=vmem, size = 0x12000, scoped, tag = 'internal scratch']
  %s0 = inlined_call_operand.vmem [shape: f32[128,32], index: 0, kind: input, shape index: {}]
  %s1 = inlined_call_operand.vmem [shape: f32[128,32], index: 1, kind: input, shape index: {}]
  %s2 = inlined_call_operand.vmem [shape: f32[128,1], index: 2, kind: input, shape index: {}]
  %s3 = inlined_call_operand.vmem [shape: f32[128,1], index: 3, kind: output, shape index: {}]
  %s4 = sld [smem:[#allocation0]]
  $region22: #{tpu_custom_call.1} parent=0
    _
  %s6 = ssub.s32 1, %s4
  %s7 = scalar_select 0, %s6, %s4
  // Predicated region
  $region2: #{tpu_custom_call.1} parent=0 // pred_check
    _
  $region3: #{tpu_custom_call.1} parent=0 // pred_check_branch
    %9 = sbr.rel (0) target = $region5
  $region4: #{tpu_custom_call.1} parent=0 // pred_region
    _
  $region5: #{tpu_custom_call.1} parent=0 // pred_fallthru
    _
  // Predicated region
  $region6: #{tpu_custom_call.1} parent=0 // pred_check
    _
  $region7: #{tpu_custom_call.1} parent=0 // pred_check_branch
    %11 = sbr.rel (0) target = $region9
  $region8: #{tpu_custom_call.1} parent=0 // pred_region
    _
  $region9: #{tpu_custom_call.1} parent=0 // pred_fallthru
    _
  // Predicated region
  $region10: #{tpu_custom_call.1} parent=0 // pred_check
    _
  $region11: #{tpu_custom_call.1} parent=0 // pred_check_branch
    %13 = sbr.rel (0) target = $region13
  $region12: #{tpu_custom_call.1} parent=0 // pred_region
    _
  $region13: #{tpu_custom_call.1} parent=0 // pred_fallthru
    _
  %v14 = vld [vmem:[%s2] sm:$0xff]
  %v15 = vld [vmem:[%s2 + $0x8] sm:$0xff]
  %v16 = vld [vmem:[%s2 + $0x10] sm:$0xff]
  %v17 = vld [vmem:[%s2 + $0x18] sm:$0xff]
  %v18 = vld [vmem:[%s2 + $0x20] sm:$0xff]
  %v19 = vld [vmem:[%s2 + $0x28] sm:$0xff]
  %v20 = vld [vmem:[%s2 + $0x30] sm:$0xff]
  %v21 = vld [vmem:[%s2 + $0x38] sm:$0xff]
  %v22 = vld [vmem:[%s2 + $0x40] sm:$0xff]
  %v23 = vld [vmem:[%s2 + $0x48] sm:$0xff]
  %v24 = vld [vmem:[%s2 + $0x50] sm:$0xff]
  %v25 = vld [vmem:[%s2 + $0x58] sm:$0xff]
  %v26 = vld [vmem:[%s2 + $0x60] sm:$0xff]
  %v27 = vld [vmem:[%s2 + $0x68] sm:$0xff]
  %v28 = vld [vmem:[%s2 + $0x70] sm:$0xff]
  %v29 = vld [vmem:[%s2 + $0x78] sm:$0xff]
  %v30 = vld [vmem:[%s0] sm:$0xff]
  %v31 = vld [vmem:[%s0 + $0x8] sm:$0xff]
  %v32 = vld [vmem:[%s0 + $0x10] sm:$0xff]
  %v33 = vld [vmem:[%s0 + $0x18] sm:$0xff]
  %v34 = vld [vmem:[%s0 + $0x20] sm:$0xff]
  %v35 = vld [vmem:[%s0 + $0x28] sm:$0xff]
  %v36 = vld [vmem:[%s0 + $0x30] sm:$0xff]
  %v37 = vld [vmem:[%s0 + $0x38] sm:$0xff]
  %v38 = vld [vmem:[%s0 + $0x40] sm:$0xff]
  %v39 = vld [vmem:[%s0 + $0x48] sm:$0xff]
  %v40 = vld [vmem:[%s0 + $0x50] sm:$0xff]
  %v41 = vld [vmem:[%s0 + $0x58] sm:$0xff]
  %v42 = vld [vmem:[%s0 + $0x60] sm:$0xff]
  %v43 = vld [vmem:[%s0 + $0x68] sm:$0xff]
  %v44 = vld [vmem:[%s0 + $0x70] sm:$0xff]
  %v45 = vld [vmem:[%s0 + $0x78] sm:$0xff]
  %v46 = vld [vmem:[%s1] sm:$0xff]
  %v47 = vld [vmem:[%s1 + $0x8] sm:$0xff]
  %v48 = vld [vmem:[%s1 + $0x10] sm:$0xff]
  %v49 = vld [vmem:[%s1 + $0x18] sm:$0xff]
  %v50 = vld [vmem:[%s1 + $0x20] sm:$0xff]
  %v51 = vld [vmem:[%s1 + $0x28] sm:$0xff]
  %v52 = vld [vmem:[%s1 + $0x30] sm:$0xff]
  %v53 = vld [vmem:[%s1 + $0x38] sm:$0xff]
  %v54 = vld [vmem:[%s1 + $0x40] sm:$0xff]
  %v55 = vld [vmem:[%s1 + $0x48] sm:$0xff]
  %v56 = vld [vmem:[%s1 + $0x50] sm:$0xff]
  %v57 = vld [vmem:[%s1 + $0x58] sm:$0xff]
  %v58 = vld [vmem:[%s1 + $0x60] sm:$0xff]
  %v59 = vld [vmem:[%s1 + $0x68] sm:$0xff]
  %v60 = vld [vmem:[%s1 + $0x70] sm:$0xff]
  %v61 = vld [vmem:[%s1 + $0x78] sm:$0xff]
  %v62 = vmul.f32 %v30, %v46
  %v63 = vmul.f32 %v31, %v47
  %v64 = vmul.f32 %v32, %v48
  %v65 = vmul.f32 %v33, %v49
  %v66 = vmul.f32 %v34, %v50
  %v67 = vmul.f32 %v35, %v51
  %v68 = vmul.f32 %v36, %v52
  %v69 = vmul.f32 %v37, %v53
  %v70 = vmul.f32 %v38, %v54
  %v71 = vmul.f32 %v39, %v55
  %v72 = vmul.f32 %v40, %v56
  %v73 = vmul.f32 %v41, %v57
  %v74 = vmul.f32 %v42, %v58
  %v75 = vmul.f32 %v43, %v59
  %v76 = vmul.f32 %v44, %v60
  %v77 = vmul.f32 %v45, %v61
  %vm78 = vcmask 261120
  %v79 = vsel %vm78, %v62, 0.0
  %80 = vadd.xlane.f32.xlu0 %v79
  %v81 = vpop.xlane.xlu0 %80
  %v82 = vsel %vm78, %v63, 0.0
  %83 = vadd.xlane.f32.xlu0 %v82
  %v84 = vpop.xlane.xlu0 %83
  %v85 = vsel %vm78, %v64, 0.0
  %86 = vadd.xlane.f32.xlu0 %v85
  %v87 = vpop.xlane.xlu0 %86
  %v88 = vsel %vm78, %v65, 0.0
  %89 = vadd.xlane.f32.xlu0 %v88
  %v90 = vpop.xlane.xlu0 %89
  %v91 = vsel %vm78, %v66, 0.0
  %92 = vadd.xlane.f32.xlu0 %v91
  %v93 = vpop.xlane.xlu0 %92
  %v94 = vsel %vm78, %v67, 0.0
  %95 = vadd.xlane.f32.xlu0 %v94
  %v96 = vpop.xlane.xlu0 %95
  %v97 = vsel %vm78, %v68, 0.0
  %98 = vadd.xlane.f32.xlu0 %v97
  %v99 = vpop.xlane.xlu0 %98
  %v100 = vsel %vm78, %v69, 0.0
  %101 = vadd.xlane.f32.xlu0 %v100
  %v102 = vpop.xlane.xlu0 %101
  %v103 = vsel %vm78, %v70, 0.0
  %104 = vadd.xlane.f32.xlu0 %v103
  %v105 = vpop.xlane.xlu0 %104
  %v106 = vsel %vm78, %v71, 0.0
  %107 = vadd.xlane.f32.xlu0 %v106
  %v108 = vpop.xlane.xlu0 %107
  %v109 = vsel %vm78, %v72, 0.0
  %110 = vadd.xlane.f32.xlu0 %v109
  %v111 = vpop.xlane.xlu0 %110
  %v112 = vsel %vm78, %v73, 0.0
  %113 = vadd.xlane.f32.xlu0 %v112
  %v114 = vpop.xlane.xlu0 %113
  %v115 = vsel %vm78, %v74, 0.0
  %116 = vadd.xlane.f32.xlu0 %v115
  %v117 = vpop.xlane.xlu0 %116
  %v118 = vsel %vm78, %v75, 0.0
  %119 = vadd.xlane.f32.xlu0 %v118
  %v120 = vpop.xlane.xlu0 %119
  %v121 = vsel %vm78, %v76, 0.0
  %122 = vadd.xlane.f32.xlu0 %v121
  %v123 = vpop.xlane.xlu0 %122
  %v124 = vsel %vm78, %v77, 0.0
  %125 = vadd.xlane.f32.xlu0 %v124
  %v126 = vpop.xlane.xlu0 %125
  %v127 = vadd.f32 %v14, %v81
  %v128 = vadd.f32 %v15, %v84
  %v129 = vadd.f32 %v16, %v87
  %v130 = vadd.f32 %v17, %v90
  %v131 = vadd.f32 %v18, %v93
  %v132 = vadd.f32 %v19, %v96
  %v133 = vadd.f32 %v20, %v99
  %v134 = vadd.f32 %v21, %v102
  %v135 = vadd.f32 %v22, %v105
  %v136 = vadd.f32 %v23, %v108
  %v137 = vadd.f32 %v24, %v111
  %v138 = vadd.f32 %v25, %v114
  %v139 = vadd.f32 %v26, %v117
  %v140 = vadd.f32 %v27, %v120
  %v141 = vadd.f32 %v28, %v123
  %v142 = vadd.f32 %v29, %v126
  %vm143 = vcmask 7168
  %144 = vst.msk [vmem:[%s3] sm:$0xff] %vm143, %v127
  %145 = vst.msk [vmem:[%s3 + $0x8] sm:$0xff] %vm143, %v128
  %146 = vst.msk [vmem:[%s3 + $0x10] sm:$0xff] %vm143, %v129
  %147 = vst.msk [vmem:[%s3 + $0x18] sm:$0xff] %vm143, %v130
  %148 = vst.msk [vmem:[%s3 + $0x20] sm:$0xff] %vm143, %v131
  %149 = vst.msk [vmem:[%s3 + $0x28] sm:$0xff] %vm143, %v132
  %150 = vst.msk [vmem:[%s3 + $0x30] sm:$0xff] %vm143, %v133
  %151 = vst.msk [vmem:[%s3 + $0x38] sm:$0xff] %vm143, %v134
  %152 = vst.msk [vmem:[%s3 + $0x40] sm:$0xff] %vm143, %v135
  %153 = vst.msk [vmem:[%s3 + $0x48] sm:$0xff] %vm143, %v136
  %154 = vst.msk [vmem:[%s3 + $0x50] sm:$0xff] %vm143, %v137
  %155 = vst.msk [vmem:[%s3 + $0x58] sm:$0xff] %vm143, %v138
  %156 = vst.msk [vmem:[%s3 + $0x60] sm:$0xff] %vm143, %v139
  %157 = vst.msk [vmem:[%s3 + $0x68] sm:$0xff] %vm143, %v140
  %158 = vst.msk [vmem:[%s3 + $0x70] sm:$0xff] %vm143, %v141
  %159 = vst.msk [vmem:[%s3 + $0x78] sm:$0xff] %vm143, %v142
  // Predicated region
  $region14: #{tpu_custom_call.1} parent=0 // pred_check
    _
  $region15: #{tpu_custom_call.1} parent=0 // pred_check_branch
    %161 = sbr.rel (0) target = $region17
  $region16: #{tpu_custom_call.1} parent=0 // pred_region
    _
  $region17: #{tpu_custom_call.1} parent=0 // pred_fallthru
    _
  // Predicated region
  $region18: #{tpu_custom_call.1} parent=0 // pred_check
    _
  $region19: #{tpu_custom_call.1} parent=0 // pred_check_branch
    %163 = sbr.rel (0) target = $region21
  $region20: #{tpu_custom_call.1} parent=0 // pred_region
    _
  $region21: #{tpu_custom_call.1} parent=0 // pred_fallthru
    _

</llo_original>
